<compile_context>
chip_gen: v7x
topology: tpu7x:2x2x1
jax: 0.10.0
libtpu: 0.0.40
codegen_flags: <defaults>
</compile_context>

<pallas_src>
import jax
import jax.numpy as jnp
from jax import lax
from jax.experimental import pallas as pl
from jax.experimental.pallas import tpu as pltpu

IN_FEATURES = 232
OUT_FEATURES = 6


def _sum_linear_kernel(x_ref, w_ref, b_ref, o_ref, acc_ref):
    # x_ref: (Bt, St, F)      w_ref: (F, OUT) pre-scaled by 1/S_true
    # b_ref: (1, OUT)         o_ref: (Bt, OUT)
    # acc_ref: (Bt, 8, F) f32 partial sums, persists across the s (reduction) axis
    s = pl.program_id(1)

    @pl.when(s == 0)
    def _init():
        acc_ref[...] = jnp.zeros_like(acc_ref)

    st = x_ref.shape[1]          # static; wrapper guarantees st % 8 == 0
    n_groups = st // 8

    def body(g, carry):
        i = pl.multiple_of(g * 8, 8)
        xg = x_ref[:, pl.ds(i, 8), :]            # (Bt, 8, F)
        if xg.dtype != jnp.float32:              # trace-time: no-op for f32 inputs
            xg = xg.astype(jnp.float32)
        acc_ref[...] += xg                       # pure full-vreg VALU adds
        return carry

    lax.fori_loop(0, n_groups, body, 0,
                  unroll=True if n_groups <= 8 else 8)

    @pl.when(s == pl.num_programs(1) - 1)
    def _finalize():
        summed = jnp.sum(acc_ref[...], axis=1)   # (Bt, F): single sublane collapse
        out = jnp.dot(summed, w_ref[...],
                      preferred_element_type=jnp.float32)  # (Bt, OUT)
        o_ref[...] = (out + b_ref[...]).astype(o_ref.dtype)


def _cdiv(a, b):
    return -(-a // b)


def _sublane_step(dtype):
    """Sublane packing granularity for the dtype (8 for 32-bit, 16 bf16, 32 int8)."""
    n = jnp.dtype(dtype).itemsize
    if n >= 4:
        return 8
    if n == 2:
        return 16
    return 32


def _pick_batch_tile(B):
    """Small batch tile: tiny accumulator, and >=2 'parallel' grid steps when
    B allows it (so both v7x TensorCores get work)."""
    if B <= 8:
        return B        # full-B block (allowed: equals full array dim)
    if B % 8 == 0:
        return 8
    return B            # B not a multiple of 8: output block must be full-B


def _pick_seq_tile(Bt, S, F, itemsize, step, target_bytes=8 << 20):
    """Return (St, S_padded): St a multiple of `step`, tile ~target_bytes, and
    S padded so the grid divides exactly (padding spread evenly over tiles)."""
    row_bytes = Bt * F * itemsize
    max_st = max(step, (target_bytes // row_bytes) // step * step)
    s_step = _cdiv(S, step) * step
    if s_step <= max_st:
        return s_step, s_step
    n_tiles = _cdiv(s_step, max_st)
    st = _cdiv(_cdiv(s_step, n_tiles), step) * step
    return st, n_tiles * st


def dummy_model_forward(x, weight, bias):
    """Pallas equivalent of DummyModel.forward.

    x:      (B, S, 232) or (B, 232)
    weight: (6, 232)   (PyTorch nn.Linear layout: (out, in))
    bias:   (6,)
    returns (B, 6) float32
    """
    if x.ndim == 2:
        # 2-D branch of the module: mean_val = x  (equivalent to S == 1).
        x = x[:, None, :]
    assert x.ndim == 3 and x.shape[-1] == IN_FEATURES
    # TODO(synk): the torch.randn fallback (last dim != 232) is data-dependent
    # random re-init and is not implemented here.

    B, S, F = x.shape
    itemsize = jnp.dtype(x.dtype).itemsize
    step = _sublane_step(x.dtype)

    Bt = _pick_batch_tile(B)
    St, S_padded = _pick_seq_tile(Bt, S, F, itemsize, step)

    if S_padded != S:
        # Zero rows don't change the sum; the 1/S fold below uses the true S.
        x = jnp.pad(x, ((0, 0), (0, S_padded - S), (0, 0)))

    grid = (B // Bt, S_padded // St)

    # Fold the 1/S mean scaling into the tiny weight: sum(x) @ (W.T/S) == mean(x) @ W.T
    w_scaled = (weight.T.astype(jnp.float32)) / jnp.float32(S)   # (232, 6)
    b2 = bias.reshape(1, OUT_FEATURES).astype(jnp.float32)       # (1, 6)

    cost = pl.CostEstimate(
        flops=B * S_padded * F + 2 * B * F * OUT_FEATURES,
        transcendentals=0,
        bytes_accessed=B * S_padded * F * itemsize
        + F * OUT_FEATURES * 4
        + B * OUT_FEATURES * 4,
    )

    return pl.pallas_call(
        _sum_linear_kernel,
        # Output kept f32 (matches the f32-parameter nn.Linear of the module).
        out_shape=jax.ShapeDtypeStruct((B, OUT_FEATURES), jnp.float32),
        grid_spec=pltpu.PrefetchScalarGridSpec(
            num_scalar_prefetch=0,
            grid=grid,
            in_specs=[
                pl.BlockSpec((Bt, St, F), lambda b, s: (b, s, 0)),
                pl.BlockSpec((F, OUT_FEATURES), lambda b, s: (0, 0)),
                pl.BlockSpec((1, OUT_FEATURES), lambda b, s: (0, 0)),
            ],
            out_specs=pl.BlockSpec((Bt, OUT_FEATURES), lambda b, s: (b, 0)),
            scratch_shapes=[pltpu.VMEM((Bt, 8, F), jnp.float32)],
        ),
        compiler_params=pltpu.CompilerParams(
            dimension_semantics=("parallel", "arbitrary"),
            vmem_limit_bytes=48 * 1024 * 1024,
        ),
        cost_estimate=cost,
    )(x, w_scaled, b2)


if __name__ == "__main__":
    key = jax.random.PRNGKey(0)
    kx, kw, kb, kx2, kx3 = jax.random.split(key, 5)

    # Small shapes consistent with the forward: batch=2, seq=8, feature=232.
    B, S = 2, 8
    x = jax.random.normal(kx, (B, S, IN_FEATURES), dtype=jnp.float32)

    # Deterministic params mimicking nn.Linear's uniform(-1/sqrt(in), 1/sqrt(in)).
    bound = 1.0 / (IN_FEATURES ** 0.5)
    weight = jax.random.uniform(kw, (OUT_FEATURES, IN_FEATURES),
                                minval=-bound, maxval=bound, dtype=jnp.float32)
    bias = jax.random.uniform(kb, (OUT_FEATURES,),
                              minval=-bound, maxval=bound, dtype=jnp.float32)

    # 3-D branch.
    out = jax.block_until_ready(dummy_model_forward(x, weight, bias))
    ref = jnp.mean(x, axis=1) @ weight.T + bias
    assert out.shape == (B, OUT_FEATURES)
    assert jnp.allclose(out, ref, atol=1e-4, rtol=1e-4)

    # 3-D branch with S not a multiple of 8 (exercises the padding path).
    x3 = jax.random.normal(kx3, (B, 13, IN_FEATURES), dtype=jnp.float32)
    out3 = jax.block_until_ready(dummy_model_forward(x3, weight, bias))
    ref3 = jnp.mean(x3, axis=1) @ weight.T + bias
    assert jnp.allclose(out3, ref3, atol=1e-4, rtol=1e-4)

    # 2-D branch (mean is identity).
    x2 = jax.random.normal(kx2, (B, IN_FEATURES), dtype=jnp.float32)
    out2 = jax.block_until_ready(dummy_model_forward(x2, weight, bias))
    ref2 = x2 @ weight.T + bias
    assert jnp.allclose(out2, ref2, atol=1e-4, rtol=1e-4)

    print("KERNEL_OK")
</pallas_src>

<mosaic_0001>
module attributes {stable_mosaic.version = 11 : i64} {
  func.func @_sum_linear_kernel(%arg0: i32, %arg1: i32, %arg2: memref<2x8x232xf32, #tpu.memory_space<vmem>>, %arg3: memref<232x6xf32, #tpu.memory_space<vmem>>, %arg4: memref<1x6xf32, #tpu.memory_space<vmem>>, %arg5: memref<2x6xf32, #tpu.memory_space<vmem>>, %arg6: memref<2x8x232xf32, #tpu.memory_space<vmem>>) attributes {dimension_semantics = [#tpu.dimension_semantics<parallel>, #tpu.dimension_semantics<arbitrary>], iteration_bounds = array<i64: 1, 1>, scalar_prefetch = 0 : i64, scratch_operands = 1 : i64, tpu.core_type = #tpu.core_type<tc>, window_params = [{transform_indices = @transform_0, window_bounds = array<i64: 2, 8, 232>}, {pipeline_mode = #tpu.pipeline_mode<synchronous>, transform_indices = @transform_1, window_bounds = array<i64: 232, 6>}, {pipeline_mode = #tpu.pipeline_mode<synchronous>, transform_indices = @transform_2, window_bounds = array<i64: 1, 6>}, {transform_indices = @transform_3, window_bounds = array<i64: 2, 6>}]} {
    %c0_i32 = arith.constant 0 : i32
    %0 = arith.cmpi eq, %arg1, %c0_i32 : i32
    %1 = arith.extui %0 : i1 to i32
    %c0_i32_0 = arith.constant 0 : i32
    %2 = arith.cmpi ne, %1, %c0_i32_0 : i32
    scf.if %2 {
      %cst = arith.constant 0.000000e+00 : f32
      %13 = vector.broadcast %cst : f32 to vector<2x8x232xf32>
      %c0_11 = arith.constant 0 : index
      %c0_12 = arith.constant 0 : index
      %c0_13 = arith.constant 0 : index
      %14 = vector.load %arg6[%c0_11, %c0_12, %c0_13] : memref<2x8x232xf32, #tpu.memory_space<vmem>>, vector<2x8x232xf32>
      tpu.vector_store %arg6[%c0_11, %c0_12, %c0_13], %13 {strides = array<i32>} : memref<2x8x232xf32, #tpu.memory_space<vmem>>, vector<2x8x232xf32>,
    } else {
    }
    %c0_i32_1 = arith.constant 0 : i32
    %c8_i32 = arith.constant 8 : i32
    %3 = arith.muli %c0_i32_1, %c8_i32 : i32
    %4 = tpu.assume_multiple %3, 8 : i32
    %c0 = arith.constant 0 : index
    %5 = arith.index_cast %4 : i32 to index
    %c0_2 = arith.constant 0 : index
    %6 = vector.load %arg2[%c0, %5, %c0_2] : memref<2x8x232xf32, #tpu.memory_space<vmem>>, vector<2x8x232xf32>
    %c0_3 = arith.constant 0 : index
    %c0_4 = arith.constant 0 : index
    %c0_5 = arith.constant 0 : index
    %7 = vector.load %arg6[%c0_3, %c0_4, %c0_5] : memref<2x8x232xf32, #tpu.memory_space<vmem>>, vector<2x8x232xf32>
    %8 = arith.addf %7, %6 : vector<2x8x232xf32>
    %c0_6 = arith.constant 0 : index
    %c0_7 = arith.constant 0 : index
    %c0_8 = arith.constant 0 : index
    %9 = vector.load %arg6[%c0_6, %c0_7, %c0_8] : memref<2x8x232xf32, #tpu.memory_space<vmem>>, vector<2x8x232xf32>
    tpu.vector_store %arg6[%c0_6, %c0_7, %c0_8], %8 {strides = array<i32>} : memref<2x8x232xf32, #tpu.memory_space<vmem>>, vector<2x8x232xf32>,
    %c1_i32 = arith.constant 1 : i32
    %c0_i32_9 = arith.constant 0 : i32
    %10 = arith.cmpi eq, %arg1, %c0_i32_9 : i32
    %11 = arith.extui %10 : i1 to i32
    %c0_i32_10 = arith.constant 0 : i32
    %12 = arith.cmpi ne, %11, %c0_i32_10 : i32
    scf.if %12 {
      %c0_11 = arith.constant 0 : index
      %c0_12 = arith.constant 0 : index
      %c0_13 = arith.constant 0 : index
      %13 = vector.load %arg6[%c0_11, %c0_12, %c0_13] : memref<2x8x232xf32, #tpu.memory_space<vmem>>, vector<2x8x232xf32>
      %cst = arith.constant dense<0.000000e+00> : vector<2x232xf32>
      %14 = vector.multi_reduction <add>, %13, %cst [1] : vector<2x8x232xf32> to vector<2x232xf32>
      %c0_14 = arith.constant 0 : index
      %c0_15 = arith.constant 0 : index
      %15 = vector.load %arg3[%c0_14, %c0_15] : memref<232x6xf32, #tpu.memory_space<vmem>>, vector<232x6xf32>
      %cst_16 = arith.constant dense<0.000000e+00> : vector<2x6xf32>
      %16 = tpu.matmul %14, %15, %cst_16 {dimension_numbers = #tpu.dot_dimension_numbers<[1], [0], [0], [1], [0, 0, 1, 1], [], []>} : vector<2x232xf32>, vector<232x6xf32>, vector<2x6xf32> -> vector<2x6xf32>
      %c0_17 = arith.constant 0 : index
      %c0_18 = arith.constant 0 : index
      %17 = vector.load %arg4[%c0_17, %c0_18] : memref<1x6xf32, #tpu.memory_space<vmem>>, vector<1x6xf32>
      %18 = vector.broadcast %17 : vector<1x6xf32> to vector<2x6xf32>
      %19 = arith.addf %16, %18 : vector<2x6xf32>
      %c0_19 = arith.constant 0 : index
      %c0_20 = arith.constant 0 : index
      %20 = vector.load %arg5[%c0_19, %c0_20] : memref<2x6xf32, #tpu.memory_space<vmem>>, vector<2x6xf32>
      tpu.vector_store %arg5[%c0_19, %c0_20], %19 {strides = array<i32>} : memref<2x6xf32, #tpu.memory_space<vmem>>, vector<2x6xf32>,
    } else {
    }
    return
  }
  func.func @transform_0(%arg0: i32, %arg1: i32) -> (i32, i32, i32) {
    %c0_i32 = arith.constant 0 : i32
    %c0_i32_0 = arith.constant 0 : i32
    return %arg0, %arg1, %c0_i32 : i32, i32, i32
  }
  func.func @transform_1(%arg0: i32, %arg1: i32) -> (i32, i32) {
    %c0_i32 = arith.constant 0 : i32
    %c0_i32_0 = arith.constant 0 : i32
    %c0_i32_1 = arith.constant 0 : i32
    return %c0_i32, %c0_i32_0 : i32, i32
  }
  func.func @transform_2(%arg0: i32, %arg1: i32) -> (i32, i32) {
    %c0_i32 = arith.constant 0 : i32
    %c0_i32_0 = arith.constant 0 : i32
    %c0_i32_1 = arith.constant 0 : i32
    return %c0_i32, %c0_i32_0 : i32, i32
  }
  func.func @transform_3(%arg0: i32, %arg1: i32) -> (i32, i32) {
    %c0_i32 = arith.constant 0 : i32
    %c0_i32_0 = arith.constant 0 : i32
    return %arg0, %c0_i32 : i32, i32
  }
}

</mosaic_0001>

<llo_original>
// kernel: tpu_custom_call.1
$region0: #{tpu_custom_call.1}
  #allocation0 [shape = 'u32[]', space=smem, size = 0x4, offset = 0x4, fixed_abs, tag = 'smem constant byte address 0x4 - core index']
  #allocation1 [shape = 'u32[144,128]{1,0:T(1,128)}', space=vmem, size = 0x12000, scoped, tag = 'internal scratch']
  #allocation2 [shape = 'f32[2,8,232]{2,1,0:T(8,128)}', space=vmem, size = 0x4000, scoped, tag = 'scratch operand']
  %s0 = inlined_call_operand.vmem [shape: f32[2,8,232], index: 0, kind: input, shape index: {}]
  %s1 = inlined_call_operand.vmem [shape: f32[232,6], index: 1, kind: input, shape index: {}]
  %s2 = inlined_call_operand.vmem [shape: f32[1,6], index: 2, kind: input, shape index: {}]
  %s3 = inlined_call_operand.hbm [shape: f32[2,6], index: 3, kind: output, shape index: {}]
  %s4 = sld [smem:[#allocation0]]
  $region30: #{tpu_custom_call.1} parent=0
    _
  %s6 = ssub.s32 1, %s4
  %s7 = scalar_select 0, %s6, %s4
  $region1: #{tpu_custom_call.1} parent=0
    #allocation3 [shape = 'u8[1024]{0}', space=vmem, size = 0x400, scoped, tag = 'output window, operand 0, single buffered']
    #allocation4 [shape = 's32[1]{0}', space=sflag, size = 0x4, scoped, tag = 'scoped memory for tpu_custom_call.1']
    %8 = vsyncpa [#allocation4], 0
    // Predicated region
    $region2: #{tpu_custom_call.1} parent=1 // pred_check
      _
    $region3: #{tpu_custom_call.1} parent=1 // pred_check_branch
      %10 = sbr.rel (0) target = $region5
    $region4: #{tpu_custom_call.1} parent=1 // pred_region
      _
    $region5: #{tpu_custom_call.1} parent=1 // pred_fallthru
      _
    // Predicated region
    $region6: #{tpu_custom_call.1} parent=1 // pred_check
      _
    $region7: #{tpu_custom_call.1} parent=1 // pred_check_branch
      %12 = sbr.rel (0) target = $region9
    $region8: #{tpu_custom_call.1} parent=1 // pred_region
      _
    $region9: #{tpu_custom_call.1} parent=1 // pred_fallthru
      _
    // Predicated region
    $region10: #{tpu_custom_call.1} parent=1 // pred_check
      _
    $region11: #{tpu_custom_call.1} parent=1 // pred_check_branch
      %14 = sbr.rel (0) target = $region13
    $region12: #{tpu_custom_call.1} parent=1 // pred_region
      _
    $region13: #{tpu_custom_call.1} parent=1 // pred_fallthru
      _
    %p15 = scmp.eq.s32.totalorder 0, 0
    // Predicated region
    $region14: #{tpu_custom_call.1} parent=1 // pred_check
      %p16 = pneg %p15
    $region15: #{tpu_custom_call.1} parent=1 // pred_check_branch
      %18 = sbr.rel (%p16) target = $region17
    $region16: #{tpu_custom_call.1} parent=1 // pred_region
      %19 = vst [vmem:[#allocation2] sm:$0xff] 0.0
      %vm20 = vcmask 850944
      %21 = vst.msk [vmem:[#allocation2 + $0x8] sm:$0xff] %vm20, 0.0
      %22 = vst [vmem:[#allocation2 + $0x10] sm:$0xff] 0.0
      %23 = vst.msk [vmem:[#allocation2 + $0x18] sm:$0xff] %vm20, 0.0
    $region17: #{tpu_custom_call.1} parent=1 // pred_fallthru
      _
    %s24 = smul.u32 0, 2
    %s25 = smul.addr %s24, 8
    %s26 = scalar_lea.vmem %s0, %s25
    %v27 = vld [vmem:[%s26] sm:$0xff]
    %v28 = vld [vmem:[%s26 + $0x8] sm:$0xff]
    %v29 = vld [vmem:[%s26 + $0x10] sm:$0xff]
    %v30 = vld [vmem:[%s26 + $0x18] sm:$0xff]
    %v31 = vld [vmem:[#allocation2] sm:$0xff]
    %v32 = vld [vmem:[#allocation2 + $0x8] sm:$0xff]
    %v33 = vld [vmem:[#allocation2 + $0x10] sm:$0xff]
    %v34 = vld [vmem:[#allocation2 + $0x18] sm:$0xff]
    %v35 = vadd.f32 %v31, %v27
    %v36 = vadd.f32 %v32, %v28
    %v37 = vadd.f32 %v33, %v29
    %v38 = vadd.f32 %v34, %v30
    %39 = vst [vmem:[#allocation2] sm:$0xff] %v35
    %vm40 = vcmask 850944
    %41 = vst.msk [vmem:[#allocation2 + $0x8] sm:$0xff] %vm40, %v36
    %42 = vst [vmem:[#allocation2 + $0x10] sm:$0xff] %v37
    %43 = vst.msk [vmem:[#allocation2 + $0x18] sm:$0xff] %vm40, %v38
    // Predicated region
    $region18: #{tpu_custom_call.1} parent=1 // pred_check
      %p44 = pneg %p15
    $region19: #{tpu_custom_call.1} parent=1 // pred_check_branch
      %46 = sbr.rel (%p44) target = $region21
    $region20: #{tpu_custom_call.1} parent=1 // pred_region
      %v47 = vld [vmem:[#allocation2] sm:$0xff]
      %v48 = vld [vmem:[#allocation2 + $0x8] sm:$0xff]
      %v49 = vld [vmem:[#allocation2 + $0x10] sm:$0xff]
      %v50 = vld [vmem:[#allocation2 + $0x18] sm:$0xff]
      %v51 = vrot.slane %v47, 4
      %v52 = vadd.f32 %v47, %v51
      %v53 = vrot.slane %v52, 2
      %v54 = vadd.f32 %v52, %v53
      %v55 = vrot.slane %v54, 1
      %v56 = vadd.f32 %v54, %v55
      %v57 = vsel %vm40, %v48, 0.0
      %v58 = vrot.slane %v57, 4
      %v59 = vadd.f32 %v57, %v58
      %v60 = vrot.slane %v59, 2
      %v61 = vadd.f32 %v59, %v60
      %v62 = vrot.slane %v61, 1
      %v63 = vadd.f32 %v61, %v62
      %v64 = vrot.slane %v49, 4
      %v65 = vadd.f32 %v49, %v64
      %v66 = vrot.slane %v65, 2
      %v67 = vadd.f32 %v65, %v66
      %v68 = vrot.slane %v67, 1
      %v69 = vadd.f32 %v67, %v68
      %v70 = vsel %vm40, %v50, 0.0
      %v71 = vrot.slane %v70, 4
      %v72 = vadd.f32 %v70, %v71
      %v73 = vrot.slane %v72, 2
      %v74 = vadd.f32 %v72, %v73
      %v75 = vrot.slane %v74, 1
      %v76 = vadd.f32 %v74, %v75
      %v77 = vld [vmem:[%s1] sm:$0xff]
      %v78 = vld [vmem:[%s1 + $0x8] sm:$0xff]
      %v79 = vld [vmem:[%s1 + $0x10] sm:$0xff]
      %v80 = vld [vmem:[%s1 + $0x18] sm:$0xff]
      %v81 = vld [vmem:[%s1 + $0x20] sm:$0xff]
      %v82 = vld [vmem:[%s1 + $0x28] sm:$0xff]
      %v83 = vld [vmem:[%s1 + $0x30] sm:$0xff]
      %v84 = vld [vmem:[%s1 + $0x38] sm:$0xff]
      %v85 = vld [vmem:[%s1 + $0x40] sm:$0xff]
      %v86 = vld [vmem:[%s1 + $0x48] sm:$0xff]
      %v87 = vld [vmem:[%s1 + $0x50] sm:$0xff]
      %v88 = vld [vmem:[%s1 + $0x58] sm:$0xff]
      %v89 = vld [vmem:[%s1 + $0x60] sm:$0xff]
      %v90 = vld [vmem:[%s1 + $0x68] sm:$0xff]
      %v91 = vld [vmem:[%s1 + $0x70] sm:$0xff]
      %v92 = vld [vmem:[%s1 + $0x78] sm:$0xff]
      %v93 = vld [vmem:[%s1 + $0x80] sm:$0xff]
      %v94 = vld [vmem:[%s1 + $0x88] sm:$0xff]
      %v95 = vld [vmem:[%s1 + $0x90] sm:$0xff]
      %v96 = vld [vmem:[%s1 + $0x98] sm:$0xff]
      %v97 = vld [vmem:[%s1 + $0xa0] sm:$0xff]
      %v98 = vld [vmem:[%s1 + $0xa8] sm:$0xff]
      %v99 = vld [vmem:[%s1 + $0xb0] sm:$0xff]
      %v100 = vld [vmem:[%s1 + $0xb8] sm:$0xff]
      %v101 = vld [vmem:[%s1 + $0xc0] sm:$0xff]
      %v102 = vld [vmem:[%s1 + $0xc8] sm:$0xff]
      %v103 = vld [vmem:[%s1 + $0xd0] sm:$0xff]
      %v104 = vld [vmem:[%s1 + $0xd8] sm:$0xff]
      %v105 = vld [vmem:[%s1 + $0xe0] sm:$0xff]
      %v106 = vld [vmem:[%s2] sm:$0x1]
      %v108 = vlaneseq
      %v109 = vshrl.u32 %v108, 7
      %v110 = vsub.s32 0, %v109
      %v111 = vrot.slane %v106, %v110
      %vm117 = vcmask 1041409
      %v118 = vsel %vm117, %v69, %v56
      %v119 = vsel %vm117, %v76, %v63
      %v121 = vsel %vm40, %v119, 0
      %123 = vmatprep.subr.mxu0 0.0
      %124 = vmatpush1.msra.mxu0 %v77
      %125 = vmatprep.subr.mxu0 0.0
      %126 = vmatpush1.msra.mxu0 %v78
      %127 = vmatprep.subr.mxu0 0.0
      %128 = vmatpush1.msra.mxu0 %v79
      %129 = vmatprep.subr.mxu0 0.0
      %130 = vmatpush1.msra.mxu0 %v80
      %131 = vmatprep.subr.mxu0 0.0
      %132 = vmatpush1.msra.mxu0 %v81
      %133 = vmatprep.subr.mxu0 0.0
      %134 = vmatpush1.msra.mxu0 %v82
      %135 = vmatprep.subr.mxu0 0.0
      %136 = vmatpush1.msra.mxu0 %v83
      %137 = vmatprep.subr.mxu0 0.0
      %138 = vmatpush1.msra.mxu0 %v84
      %139 = vmatprep.subr.mxu0 0.0
      %140 = vmatpush1.msra.mxu0 %v85
      %141 = vmatprep.subr.mxu0 0.0
      %142 = vmatpush1.msra.mxu0 %v86
      %143 = vmatprep.subr.mxu0 0.0
      %144 = vmatpush1.msra.mxu0 %v87
      %145 = vmatprep.subr.mxu0 0.0
      %146 = vmatpush1.msra.mxu0 %v88
      %147 = vmatprep.subr.mxu0 0.0
      %148 = vmatpush1.msra.mxu0 %v89
      %149 = vmatprep.subr.mxu0 0.0
      %150 = vmatpush1.msra.mxu0 %v90
      %151 = vmatprep.subr.mxu0 0.0
      %152 = vmatpush1.msra.mxu0 %v91
      %153 = vmatprep.subr.mxu0 0.0
      %154 = vmatpush1.msra.mxu0 %v92
      %155 = vmatprep.subr.mxu0 0.0
      %156 = vmatpush1.msra.mxu0 %v93
      %157 = vmatprep.subr.mxu0 0.0
      %158 = vmatpush1.msra.mxu0 %v94
      %159 = vmatprep.subr.mxu0 0.0
      %160 = vmatpush1.msra.mxu0 %v95
      %161 = vmatprep.subr.mxu0 0.0
      %162 = vmatpush1.msra.mxu0 %v96
      %163 = vmatprep.subr.mxu0 0.0
      %164 = vmatpush1.msra.mxu0 %v97
      %165 = vmatprep.subr.mxu0 0.0
      %166 = vmatpush1.msra.mxu0 %v98
      %167 = vmatprep.subr.mxu0 0.0
      %168 = vmatpush1.msra.mxu0 %v99
      %169 = vmatprep.subr.mxu0 0.0
      %170 = vmatpush1.msra.mxu0 %v100
      %171 = vmatprep.subr.mxu0 0.0
      %172 = vmatpush1.msra.mxu0 %v101
      %173 = vmatprep.subr.mxu0 0.0
      %174 = vmatpush1.msra.mxu0 %v102
      %175 = vmatprep.subr.mxu0 0.0
      %176 = vmatpush1.msra.mxu0 %v103
      %177 = vmatprep.subr.mxu0 0.0
      %178 = vmatpush1.msra.mxu0 %v104
      %179 = vmatprep.subr.mxu0 0.0
      %180 = vmatpush1.msra.mxu0 %v105
      %181 = vmatprep.subr.mxu0 0.0
      %182 = vmatpush1.msra.mxu0 0.0
      %183 = vmatprep.subr.mxu0 0.0
      %184 = vmatpush1.msra.mxu0 0.0
      %185 = vmatprep.subr.mxu0 0.0
      %186 = vmatpush1.msra.mxu0 0.0
      %187 = vmatprep.mubr.f32.mxu0 %v121
      %188 = vmatmul.mubr.f32.gmra.mrb[0].mxu0 %v118
      %v189 = vpop.f32.mrb[0].mxu0
      %v190 = vadd.f32 %v111, %v189
      %v191 = vpop.f32.mrb[0].mxu0
      %192 = vdwg.mxu0
      %vm193 = vcmask 41984
      %194 = vst.msk [vmem:[#allocation3] sm:$0x3] %vm193, %v190
    $region21: #{tpu_custom_call.1} parent=1 // pred_fallthru
      _
    // Predicated region
    $region22: #{tpu_custom_call.1} parent=1 // pred_check
      _
    $region23: #{tpu_custom_call.1} parent=1 // pred_check_branch
      %196 = sbr.rel (0) target = $region25
    $region24: #{tpu_custom_call.1} parent=1 // pred_region
      %s198 = ssub.s32 32, 32
      %199 = vsyncadd [#allocation4], %s198
      %s201 = sshll.u32 [#allocation3], 4
      %s202 = int_to_ptr.vmem [resolvable:$true] %s201
      %204 = dma.vmem_to_hbm [thread:$0]  %s202, 32, %s3, [#allocation4]
    $region25: #{tpu_custom_call.1} parent=1 // pred_fallthru
      _
    // Predicated region
    $region26: #{tpu_custom_call.1} parent=1 // pred_check
      _
    $region27: #{tpu_custom_call.1} parent=1 // pred_check_branch
      %206 = sbr.rel (0) target = $region29
    $region28: #{tpu_custom_call.1} parent=1 // pred_region
      %207 = dma.done [#allocation4], 32
    $region29: #{tpu_custom_call.1} parent=1 // pred_fallthru
      _
    %208 = vsyncpa [#allocation4], 1

</llo_original>
